<compile_context>
chip_gen: v7x
topology: tpu7x:2x2x1
jax: 0.10.0
libtpu: 0.0.40
codegen_flags: <defaults>
</compile_context>

<pallas_src>
import jax
import jax.numpy as jnp
from jax.experimental import pallas as pl
from jax.experimental.pallas import tpu as pltpu


# ----------------------------- kernels ------------------------------------ #

def _se_kernel_nchw(x_ref, w1t_ref, b1_ref, w2t_ref, b2_ref, o_ref):
    # x_ref: (Bt, C, HW) tile; HW on the lane axis.
    x = x_ref[...]

    # squeeze: global average pool over spatial, f32 accumulation without
    # materializing an f32 copy of the whole tile.
    mean = jnp.mean(x, axis=2, dtype=jnp.float32)                     # (Bt, C)

    # conv_reduce (1x1 conv == channel matmul, batched over Bt images) + SiLU.
    h = jnp.dot(mean, w1t_ref[...],
                preferred_element_type=jnp.float32) + b1_ref[...]     # (Bt, S)
    h = h * jax.nn.sigmoid(h)

    # conv_expand + Sigmoid.
    s = jnp.dot(h, w2t_ref[...],
                preferred_element_type=jnp.float32) + b2_ref[...]     # (Bt, C)
    s = jax.nn.sigmoid(s)

    # excite: per-(image, channel) scale broadcast over spatial lanes.
    # TODO(synk): if the bundle ever shows this lane->sublane relayout of s on
    # the per-step critical path (bf16 inputs), route such shapes through the
    # channels-last kernel below instead.
    o_ref[...] = (s.astype(x.dtype)[:, :, None] * x).astype(o_ref.dtype)


def _se_kernel_nhwc(x_ref, w1t_ref, b1_ref, w2t_ref, b2_ref, o_ref):
    # x_ref: (Bt, HW, C) tile; C on the lane axis so stores stay lane-dense
    # when HW % 128 != 0 (e.g. 7x7 feature maps).
    x = x_ref[...]

    mean = jnp.mean(x, axis=1, dtype=jnp.float32)                     # (Bt, C)

    h = jnp.dot(mean, w1t_ref[...],
                preferred_element_type=jnp.float32) + b1_ref[...]     # (Bt, S)
    h = h * jax.nn.sigmoid(h)

    s = jnp.dot(h, w2t_ref[...],
                preferred_element_type=jnp.float32) + b2_ref[...]     # (Bt, C)
    s = jax.nn.sigmoid(s)

    # s already has C on lanes -> broadcast over the sublane (HW) axis, no
    # cross-lane relayout needed.
    o_ref[...] = (s.astype(x.dtype)[:, None, :] * x).astype(o_ref.dtype)


# --------------------------- tiling heuristics ----------------------------- #

def _chip_config():
    """Per-TPU-generation block / VMEM budgets."""
    kind = ""
    try:
        kind = jax.devices()[0].device_kind.lower()
    except Exception:  # defensive: fall back to single-core defaults
        pass
    if "v7" in kind:
        # 2 TensorCores, only 64 MiB VMEM per TC: keep blocks <= 4 MiB, scoped
        # VMEM <= 32 MiB, and >= 2 grid steps per core for prefetch/writeback
        # overlap on both cores.
        return {"target_block_bytes": 4 << 20,
                "vmem_limit_bytes": 32 << 20,
                "min_grid_steps": 4}
    # v5e / v6e: single TensorCore, 128 MiB physical VMEM. No reason to force
    # extra grid steps; bigger blocks amortize the ~0.35 us per-step overhead.
    return {"target_block_bytes": 8 << 20,
            "vmem_limit_bytes": 64 << 20,
            "min_grid_steps": 1}


def _choose_batch_tile(B, per_image_bytes, fixed_bytes, cfg):
    """Pick Bt (images per grid step). Honest VMEM accounting: footprint is
    ~2x input block + 2x output block (double-buffered) + resident weights."""
    usable = cfg["vmem_limit_bytes"] - fixed_bytes
    max_block_bytes = min(cfg["target_block_bytes"], usable // 4)
    if per_image_bytes > max_block_bytes:
        # TODO(synk): add an HW-tiled two-pass variant (accumulate the GAP
        # across HW tiles into a small VMEM scratch, then revisit to apply the
        # scale) for very large feature maps instead of failing here.
        raise ValueError(
            f"one image ({per_image_bytes} B) exceeds the per-block VMEM "
            f"budget ({max_block_bytes} B); HW tiling not implemented")
    bt = max(1, max_block_bytes // per_image_bytes)
    if cfg["min_grid_steps"] > 1:
        if B >= cfg["min_grid_steps"]:
            bt = min(bt, pl.cdiv(B, cfg["min_grid_steps"]))
        elif B >= 2:
            bt = min(bt, B // 2)   # at least one step per TensorCore
    return int(min(bt, B))


# ------------------------------- wrapper ----------------------------------- #

def squeeze_excite(x, w_reduce, b_reduce, w_expand, b_expand):
    """x: (B, C, H, W) NCHW. w_reduce: (S, C), b_reduce: (S,),
    w_expand: (C, S), b_expand: (C,). Returns same shape/dtype as x."""
    B, C, H, W = x.shape
    HW = H * W
    S = w_reduce.shape[0]
    itemsize = jnp.dtype(x.dtype).itemsize
    cfg = _chip_config()

    # Layout: prefer HW on the lane axis (plain NCHW flatten). If the spatial
    # extent is not lane-dense but C is, go channels-last so the stores are
    # unmasked and the GAP / broadcast stay on the VPU.
    channels_last = (HW % 128 != 0) and (C % 128 == 0)

    if channels_last:
        # TODO(synk): this transpose is a separate XLA pass over x; layers that
        # keep activations in NHWC should feed NHWC directly instead.
        x_flat = jnp.transpose(x, (0, 2, 3, 1)).reshape(B, HW, C)
        kernel = _se_kernel_nhwc
        block = lambda bt: (bt, HW, C)
    else:
        x_flat = x.reshape(B, C, HW)
        kernel = _se_kernel_nchw
        block = lambda bt: (bt, C, HW)

    # Tiny 1x1-conv weights, pre-transposed so the kernel does
    # (Bt,C)@(C,S) and (Bt,S)@(S,C) with no in-kernel transpose.
    w1t = w_reduce.T.astype(jnp.float32)           # (C, S)
    w2t = w_expand.T.astype(jnp.float32)           # (S, C)
    b1 = b_reduce.reshape(1, S).astype(jnp.float32)
    b2 = b_expand.reshape(1, C).astype(jnp.float32)

    per_image = C * HW * itemsize
    weight_bytes = (2 * C * S + C + S) * 4
    fixed = weight_bytes + (1 << 20)               # resident weights + margin
    Bt = _choose_batch_tile(B, per_image, fixed, cfg)
    grid = (pl.cdiv(B, Bt),)                       # partial last block is masked

    # TODO(synk): for very small layers where the block ends up < ~1 MiB with
    # many grid steps, sweep pipeline_mode=pl.Buffered(3) on the x in/out specs.

    cost = pl.CostEstimate(
        flops=2 * B * C * HW + 4 * B * C * S,
        transcendentals=B * (S + C),
        bytes_accessed=2 * B * C * HW * itemsize + weight_bytes,
    )

    out_flat = pl.pallas_call(
        kernel,
        out_shape=jax.ShapeDtypeStruct(x_flat.shape, x.dtype),
        grid_spec=pltpu.PrefetchScalarGridSpec(
            num_scalar_prefetch=0,
            grid=grid,
            in_specs=[
                pl.BlockSpec(block(Bt), lambda b: (b, 0, 0)),   # x tile
                pl.BlockSpec((C, S), lambda b: (0, 0)),         # w_reduce^T (resident)
                pl.BlockSpec((1, S), lambda b: (0, 0)),         # b_reduce
                pl.BlockSpec((S, C), lambda b: (0, 0)),         # w_expand^T (resident)
                pl.BlockSpec((1, C), lambda b: (0, 0)),         # b_expand
            ],
            out_specs=pl.BlockSpec(block(Bt), lambda b: (b, 0, 0)),
        ),
        compiler_params=pltpu.CompilerParams(
            dimension_semantics=("parallel",),
            vmem_limit_bytes=cfg["vmem_limit_bytes"],
        ),
        cost_estimate=cost,
    )(x_flat, w1t, b1, w2t, b2)

    if channels_last:
        return jnp.transpose(out_flat.reshape(B, H, W, C), (0, 3, 1, 2))
    return out_flat.reshape(B, C, H, W)


# ------------------------------ reference ---------------------------------- #

def _reference(x, w_reduce, b_reduce, w_expand, b_expand):
    # Pure-JAX reference mirroring the PyTorch forward.
    scale = jnp.mean(x, axis=(2, 3), keepdims=True)                  # (B, C, 1, 1)
    scale = jnp.einsum('sc,bcij->bsij', w_reduce, scale) + b_reduce[None, :, None, None]
    scale = scale * jax.nn.sigmoid(scale)                            # SiLU
    scale = jnp.einsum('cs,bsij->bcij', w_expand, scale) + b_expand[None, :, None, None]
    scale = jax.nn.sigmoid(scale)
    return scale * x


def _make_params(key, C, S, dtype=jnp.float32):
    k1, k2, k3, k4 = jax.random.split(key, 4)
    w_reduce = jax.random.normal(k1, (S, C), dtype=dtype) * (1.0 / jnp.sqrt(C))
    b_reduce = jax.random.normal(k2, (S,), dtype=dtype) * 0.1
    w_expand = jax.random.normal(k3, (C, S), dtype=dtype) * (1.0 / jnp.sqrt(S))
    b_expand = jax.random.normal(k4, (C,), dtype=dtype) * 0.1
    return w_reduce, b_reduce, w_expand, b_expand


if __name__ == "__main__":
    kx1, kp1, kx2, kp2 = jax.random.split(jax.random.PRNGKey(0), 4)

    # Case 1: SqueezeExcite(input_c=32, expand_c=32, se_ratio=0.25) -> S=8.
    # HW = 256 is lane-dense -> NCHW-flat kernel path.
    B, C, S, H, W = 8, 32, 8, 16, 16
    x = jax.random.normal(kx1, (B, C, H, W), dtype=jnp.float32)
    params = _make_params(kp1, C, S)
    out = jax.block_until_ready(squeeze_excite(x, *params))
    ref = _reference(x, *params)
    assert out.shape == x.shape and out.dtype == x.dtype
    assert jnp.allclose(out, ref, atol=1e-4, rtol=1e-4), "NCHW path mismatch"

    # Case 2: SqueezeExcite(input_c=128, expand_c=128, se_ratio=0.25) -> S=32,
    # 7x7 map (HW=49 not lane-dense, C=128 is) -> channels-last kernel path.
    B2, C2, S2, H2, W2 = 4, 128, 32, 7, 7
    x2 = jax.random.normal(kx2, (B2, C2, H2, W2), dtype=jnp.float32)
    params2 = _make_params(kp2, C2, S2)
    out2 = jax.block_until_ready(squeeze_excite(x2, *params2))
    ref2 = _reference(x2, *params2)
    assert out2.shape == x2.shape and out2.dtype == x2.dtype
    assert jnp.allclose(out2, ref2, atol=1e-4, rtol=1e-4), "NHWC path mismatch"

    print("KERNEL_OK")
</pallas_src>

<mosaic_0001>
module attributes {stable_mosaic.version = 11 : i64} {
  func.func @_se_kernel_nchw(%arg0: i32, %arg1: memref<8x32x256xf32, #tpu.memory_space<vmem>>, %arg2: memref<32x8xf32, #tpu.memory_space<vmem>>, %arg3: memref<1x8xf32, #tpu.memory_space<vmem>>, %arg4: memref<8x32xf32, #tpu.memory_space<vmem>>, %arg5: memref<1x32xf32, #tpu.memory_space<vmem>>, %arg6: memref<8x32x256xf32, #tpu.memory_space<vmem>>) attributes {dimension_semantics = [#tpu.dimension_semantics<parallel>], iteration_bounds = array<i64: 1>, scalar_prefetch = 0 : i64, scratch_operands = 0 : i64, tpu.core_type = #tpu.core_type<tc>, window_params = [{transform_indices = @transform_0, window_bounds = array<i64: 8, 32, 256>}, {pipeline_mode = #tpu.pipeline_mode<synchronous>, transform_indices = @transform_1, window_bounds = array<i64: 32, 8>}, {pipeline_mode = #tpu.pipeline_mode<synchronous>, transform_indices = @transform_2, window_bounds = array<i64: 1, 8>}, {pipeline_mode = #tpu.pipeline_mode<synchronous>, transform_indices = @transform_3, window_bounds = array<i64: 8, 32>}, {pipeline_mode = #tpu.pipeline_mode<synchronous>, transform_indices = @transform_4, window_bounds = array<i64: 1, 32>}, {transform_indices = @transform_5, window_bounds = array<i64: 8, 32, 256>}]} {
    %c0 = arith.constant 0 : index
    %c0_0 = arith.constant 0 : index
    %c0_1 = arith.constant 0 : index
    %0 = vector.load %arg1[%c0, %c0_0, %c0_1] : memref<8x32x256xf32, #tpu.memory_space<vmem>>, vector<8x32x256xf32>
    %cst = arith.constant dense<0.000000e+00> : vector<8x32xf32>
    %1 = vector.multi_reduction <add>, %0, %cst [2] : vector<8x32x256xf32> to vector<8x32xf32>
    %cst_2 = arith.constant 2.560000e+02 : f32
    %2 = vector.broadcast %cst_2 : f32 to vector<8x32xf32>
    %3 = arith.divf %1, %2 : vector<8x32xf32>
    %c0_3 = arith.constant 0 : index
    %c0_4 = arith.constant 0 : index
    %4 = vector.load %arg2[%c0_3, %c0_4] : memref<32x8xf32, #tpu.memory_space<vmem>>, vector<32x8xf32>
    %cst_5 = arith.constant dense<0.000000e+00> : vector<8x8xf32>
    %5 = tpu.matmul %3, %4, %cst_5 {dimension_numbers = #tpu.dot_dimension_numbers<[1], [0], [0], [1], [0, 0, 1, 1], [], []>} : vector<8x32xf32>, vector<32x8xf32>, vector<8x8xf32> -> vector<8x8xf32>
    %c0_6 = arith.constant 0 : index
    %c0_7 = arith.constant 0 : index
    %6 = vector.load %arg3[%c0_6, %c0_7] : memref<1x8xf32, #tpu.memory_space<vmem>>, vector<1x8xf32>
    %7 = vector.broadcast %6 : vector<1x8xf32> to vector<8x8xf32>
    %8 = arith.addf %5, %7 : vector<8x8xf32>
    %9 = arith.negf %8 : vector<8x8xf32>
    %10 = math.exp %9 : vector<8x8xf32>
    %cst_8 = arith.constant 1.000000e+00 : f32
    %11 = vector.broadcast %cst_8 : f32 to vector<8x8xf32>
    %12 = arith.addf %11, %10 : vector<8x8xf32>
    %13 = arith.divf %11, %12 : vector<8x8xf32>
    %14 = arith.mulf %8, %13 : vector<8x8xf32>
    %c0_9 = arith.constant 0 : index
    %c0_10 = arith.constant 0 : index
    %15 = vector.load %arg4[%c0_9, %c0_10] : memref<8x32xf32, #tpu.memory_space<vmem>>, vector<8x32xf32>
    %cst_11 = arith.constant dense<0.000000e+00> : vector<8x32xf32>
    %16 = tpu.matmul %14, %15, %cst_11 {dimension_numbers = #tpu.dot_dimension_numbers<[1], [0], [0], [1], [0, 0, 1, 1], [], []>} : vector<8x8xf32>, vector<8x32xf32>, vector<8x32xf32> -> vector<8x32xf32>
    %c0_12 = arith.constant 0 : index
    %c0_13 = arith.constant 0 : index
    %17 = vector.load %arg5[%c0_12, %c0_13] : memref<1x32xf32, #tpu.memory_space<vmem>>, vector<1x32xf32>
    %18 = vector.broadcast %17 : vector<1x32xf32> to vector<8x32xf32>
    %19 = arith.addf %16, %18 : vector<8x32xf32>
    %20 = arith.negf %19 : vector<8x32xf32>
    %21 = math.exp %20 : vector<8x32xf32>
    %cst_14 = arith.constant 1.000000e+00 : f32
    %22 = vector.broadcast %cst_14 : f32 to vector<8x32xf32>
    %23 = arith.addf %22, %21 : vector<8x32xf32>
    %24 = arith.divf %22, %23 : vector<8x32xf32>
    %25 = vector.shape_cast %24 : vector<8x32xf32> to vector<8x32x1xf32>
    %26 = vector.broadcast %25 : vector<8x32x1xf32> to vector<8x32x256xf32>
    %27 = arith.mulf %26, %0 : vector<8x32x256xf32>
    %c0_15 = arith.constant 0 : index
    %c0_16 = arith.constant 0 : index
    %c0_17 = arith.constant 0 : index
    %28 = vector.load %arg6[%c0_15, %c0_16, %c0_17] : memref<8x32x256xf32, #tpu.memory_space<vmem>>, vector<8x32x256xf32>
    tpu.vector_store %arg6[%c0_15, %c0_16, %c0_17], %27 {strides = array<i32>} : memref<8x32x256xf32, #tpu.memory_space<vmem>>, vector<8x32x256xf32>,
    return
  }
  func.func @transform_0(%arg0: i32) -> (i32, i32, i32) {
    %c0_i32 = arith.constant 0 : i32
    %c0_i32_0 = arith.constant 0 : i32
    %c0_i32_1 = arith.constant 0 : i32
    return %arg0, %c0_i32, %c0_i32_0 : i32, i32, i32
  }
  func.func @transform_1(%arg0: i32) -> (i32, i32) {
    %c0_i32 = arith.constant 0 : i32
    %c0_i32_0 = arith.constant 0 : i32
    %c0_i32_1 = arith.constant 0 : i32
    return %c0_i32, %c0_i32_0 : i32, i32
  }
  func.func @transform_2(%arg0: i32) -> (i32, i32) {
    %c0_i32 = arith.constant 0 : i32
    %c0_i32_0 = arith.constant 0 : i32
    %c0_i32_1 = arith.constant 0 : i32
    return %c0_i32, %c0_i32_0 : i32, i32
  }
  func.func @transform_3(%arg0: i32) -> (i32, i32) {
    %c0_i32 = arith.constant 0 : i32
    %c0_i32_0 = arith.constant 0 : i32
    %c0_i32_1 = arith.constant 0 : i32
    return %c0_i32, %c0_i32_0 : i32, i32
  }
  func.func @transform_4(%arg0: i32) -> (i32, i32) {
    %c0_i32 = arith.constant 0 : i32
    %c0_i32_0 = arith.constant 0 : i32
    %c0_i32_1 = arith.constant 0 : i32
    return %c0_i32, %c0_i32_0 : i32, i32
  }
  func.func @transform_5(%arg0: i32) -> (i32, i32, i32) {
    %c0_i32 = arith.constant 0 : i32
    %c0_i32_0 = arith.constant 0 : i32
    %c0_i32_1 = arith.constant 0 : i32
    return %arg0, %c0_i32, %c0_i32_0 : i32, i32, i32
  }
}

</mosaic_0001>

<llo_original>
// kernel: tpu_custom_call.1
$region0: #{tpu_custom_call.1}
  #allocation0 [shape = 'u32[]', space=smem, size = 0x4, offset = 0x4, fixed_abs, tag = 'smem constant byte address 0x4 - core index']
  #allocation1 [shape = 'u32[144,128]{1,0:T(1,128)}', space=vmem, size = 0x12000, scoped, tag = 'internal scratch']
  %s0 = inlined_call_operand.hbm [shape: f32[8,32,256], index: 0, kind: input, shape index: {}]
  %s1 = inlined_call_operand.hbm [shape: f32[32,8], index: 1, kind: input, shape index: {}]
  %s2 = inlined_call_operand.hbm [shape: f32[1,8], index: 2, kind: input, shape index: {}]
  %s3 = inlined_call_operand.hbm [shape: f32[8,32], index: 3, kind: input, shape index: {}]
  %s4 = inlined_call_operand.hbm [shape: f32[1,32], index: 4, kind: input, shape index: {}]
  %s5 = inlined_call_operand.hbm [shape: f32[8,32,256], index: 5, kind: output, shape index: {}]
  %s6 = sld [smem:[#allocation0]]
  $region50: #{tpu_custom_call.1} parent=0
    _
  %s8 = ssub.s32 1, %s6
  %s9 = scalar_select 0, %s8, %s6
  $region1: #{tpu_custom_call.1} parent=0
    #allocation2 [shape = 'u8[262144]{0}', space=vmem, size = 0x40000, scoped, tag = 'input window, operand 0, single buffered']
    #allocation3 [shape = 's32[1]{0}', space=sflag, size = 0x4, scoped, tag = 'scoped memory for tpu_custom_call.1']
    #allocation4 [shape = 's32[1]{0}', space=sflag, size = 0x4, scoped, tag = 'scoped memory for tpu_custom_call.1']
    #allocation5 [shape = 'u8[16384]{0}', space=vmem, size = 0x4000, scoped, tag = 'input window, operand 1, single buffered']
    #allocation6 [shape = 's32[1]{0}', space=sflag, size = 0x4, scoped, tag = 'scoped memory for tpu_custom_call.1']
    #allocation7 [shape = 'u8[512]{0}', space=vmem, size = 0x400, scoped, tag = 'input window, operand 2, single buffered']
    #allocation8 [shape = 'u8[4096]{0}', space=vmem, size = 0x1000, scoped, tag = 'input window, operand 3, single buffered']
    #allocation9 [shape = 's32[1]{0}', space=sflag, size = 0x4, scoped, tag = 'scoped memory for tpu_custom_call.1']
    #allocation10 [shape = 'u8[512]{0}', space=vmem, size = 0x400, scoped, tag = 'input window, operand 4, single buffered']
    #allocation11 [shape = 'u8[262144]{0}', space=vmem, size = 0x40000, scoped, tag = 'output window, operand 0, single buffered']
    %10 = vsyncpa [#allocation3], 0
    %11 = vsyncpa [#allocation6], 0
    %12 = vsyncpa [#allocation9], 0
    %13 = vsyncpa [#allocation4], 0
    // Predicated region
    $region2: #{tpu_custom_call.1} parent=1 // pred_check
      _
    $region3: #{tpu_custom_call.1} parent=1 // pred_check_branch
      %15 = sbr.rel (0) target = $region5
    $region4: #{tpu_custom_call.1} parent=1 // pred_region
      %s17 = ssub.s32 8192, 8192
      %18 = vsyncadd [#allocation3], %s17
      %s19 = sshll.u32 [#allocation2], 4
      %s20 = int_to_ptr.vmem [resolvable:$true] %s19
      %25 = dma.hbm_to_vmem [thread:$0]  %s0, 8192, %s20, [#allocation3], 256, 256, 16
    $region5: #{tpu_custom_call.1} parent=1 // pred_fallthru
      _
    // Predicated region
    $region6: #{tpu_custom_call.1} parent=1 // pred_check
      _
    $region7: #{tpu_custom_call.1} parent=1 // pred_check_branch
      %27 = sbr.rel (0) target = $region9
    $region8: #{tpu_custom_call.1} parent=1 // pred_region
      %s29 = ssub.s32 512, 512
      %30 = vsyncadd [#allocation6], %s29
      %s31 = sshll.u32 [#allocation5], 4
      %s32 = int_to_ptr.vmem [resolvable:$true] %s31
      %37 = dma.hbm_to_vmem [thread:$0]  %s1, 512, %s32, [#allocation6], 128, 128, 8
    $region9: #{tpu_custom_call.1} parent=1 // pred_fallthru
      _
    // Predicated region
    $region10: #{tpu_custom_call.1} parent=1 // pred_check
      _
    $region11: #{tpu_custom_call.1} parent=1 // pred_check_branch
      %39 = sbr.rel (0) target = $region13
    $region12: #{tpu_custom_call.1} parent=1 // pred_region
      %s41 = ssub.s32 16, 16
      %42 = vsyncadd [#allocation6], %s41
      %s44 = sshll.u32 [#allocation7], 4
      %s45 = int_to_ptr.vmem [resolvable:$true] %s44
      %47 = dma.hbm_to_vmem [thread:$0]  %s2, 16, %s45, [#allocation6]
    $region13: #{tpu_custom_call.1} parent=1 // pred_fallthru
      _
    // Predicated region
    $region14: #{tpu_custom_call.1} parent=1 // pred_check
      _
    $region15: #{tpu_custom_call.1} parent=1 // pred_check_branch
      %49 = sbr.rel (0) target = $region17
    $region16: #{tpu_custom_call.1} parent=1 // pred_region
      %s51 = ssub.s32 128, 128
      %52 = vsyncadd [#allocation9], %s51
      %s54 = sshll.u32 [#allocation8], 4
      %s55 = int_to_ptr.vmem [resolvable:$true] %s54
      %57 = dma.hbm_to_vmem [thread:$0]  %s3, 128, %s55, [#allocation9]
    $region17: #{tpu_custom_call.1} parent=1 // pred_fallthru
      _
    // Predicated region
    $region18: #{tpu_custom_call.1} parent=1 // pred_check
      _
    $region19: #{tpu_custom_call.1} parent=1 // pred_check_branch
      %59 = sbr.rel (0) target = $region21
    $region20: #{tpu_custom_call.1} parent=1 // pred_region
      %s61 = ssub.s32 16, 16
      %62 = vsyncadd [#allocation9], %s61
      %s64 = sshll.u32 [#allocation10], 4
      %s65 = int_to_ptr.vmem [resolvable:$true] %s64
      %67 = dma.hbm_to_vmem [thread:$0]  %s4, 16, %s65, [#allocation9]
    $region21: #{tpu_custom_call.1} parent=1 // pred_fallthru
      _
    // Predicated region
    $region22: #{tpu_custom_call.1} parent=1 // pred_check
      _
    $region23: #{tpu_custom_call.1} parent=1 // pred_check_branch
      %69 = sbr.rel (0) target = $region25
    $region24: #{tpu_custom_call.1} parent=1 // pred_region
      %70 = dma.done [#allocation3], 8192
    $region25: #{tpu_custom_call.1} parent=1 // pred_fallthru
      _
    // Predicated region
    $region26: #{tpu_custom_call.1} parent=1 // pred_check
      _
    $region27: #{tpu_custom_call.1} parent=1 // pred_check_branch
      %72 = sbr.rel (0) target = $region29
    $region28: #{tpu_custom_call.1} parent=1 // pred_region
      %73 = dma.done [#allocation6], 512
    $region29: #{tpu_custom_call.1} parent=1 // pred_fallthru
      _
    // Predicated region
    $region30: #{tpu_custom_call.1} parent=1 // pred_check
      _
    $region31: #{tpu_custom_call.1} parent=1 // pred_check_branch
      %75 = sbr.rel (0) target = $region33
    $region32: #{tpu_custom_call.1} parent=1 // pred_region
      %76 = dma.done [#allocation6], 16
    $region33: #{tpu_custom_call.1} parent=1 // pred_fallthru
      _
    // Predicated region
    $region34: #{tpu_custom_call.1} parent=1 // pred_check
      _
    $region35: #{tpu_custom_call.1} parent=1 // pred_check_branch
      %78 = sbr.rel (0) target = $region37
    $region36: #{tpu_custom_call.1} parent=1 // pred_region
      %79 = dma.done [#allocation9], 128
    $region37: #{tpu_custom_call.1} parent=1 // pred_fallthru
      _
    // Predicated region
    $region38: #{tpu_custom_call.1} parent=1 // pred_check
      _
    $region39: #{tpu_custom_call.1} parent=1 // pred_check_branch
      %81 = sbr.rel (0) target = $region41
    $region40: #{tpu_custom_call.1} parent=1 // pred_region
      %82 = dma.done [#allocation9], 16
    $region41: #{tpu_custom_call.1} parent=1 // pred_fallthru
      _
    %v83 = vld [vmem:[#allocation2] sm:$0xff]
    %v84 = vld [vmem:[#allocation2 + $0x8] sm:$0xff]
    %v85 = vld [vmem:[#allocation2 + $0x10] sm:$0xff]
    %v86 = vld [vmem:[#allocation2 + $0x18] sm:$0xff]
    %v87 = vld [vmem:[#allocation2 + $0x20] sm:$0xff]
    %v88 = vld [vmem:[#allocation2 + $0x28] sm:$0xff]
    %v89 = vld [vmem:[#allocation2 + $0x30] sm:$0xff]
    %v90 = vld [vmem:[#allocation2 + $0x38] sm:$0xff]
    %v91 = vld [vmem:[#allocation2 + $0x40] sm:$0xff]
    %v92 = vld [vmem:[#allocation2 + $0x48] sm:$0xff]
    %v93 = vld [vmem:[#allocation2 + $0x50] sm:$0xff]
    %v94 = vld [vmem:[#allocation2 + $0x58] sm:$0xff]
    %v95 = vld [vmem:[#allocation2 + $0x60] sm:$0xff]
    %v96 = vld [vmem:[#allocation2 + $0x68] sm:$0xff]
    %v97 = vld [vmem:[#allocation2 + $0x70] sm:$0xff]
    %v98 = vld [vmem:[#allocation2 + $0x78] sm:$0xff]
    %v99 = vld [vmem:[#allocation2 + $0x80] sm:$0xff]
    %v100 = vld [vmem:[#allocation2 + $0x88] sm:$0xff]
    %v101 = vld [vmem:[#allocation2 + $0x90] sm:$0xff]
    %v102 = vld [vmem:[#allocation2 + $0x98] sm:$0xff]
    %v103 = vld [vmem:[#allocation2 + $0xa0] sm:$0xff]
    %v104 = vld [vmem:[#allocation2 + $0xa8] sm:$0xff]
    %v105 = vld [vmem:[#allocation2 + $0xb0] sm:$0xff]
    %v106 = vld [vmem:[#allocation2 + $0xb8] sm:$0xff]
    %v107 = vld [vmem:[#allocation2 + $0xc0] sm:$0xff]
    %v108 = vld [vmem:[#allocation2 + $0xc8] sm:$0xff]
    %v109 = vld [vmem:[#allocation2 + $0xd0] sm:$0xff]
    %v110 = vld [vmem:[#allocation2 + $0xd8] sm:$0xff]
    %v111 = vld [vmem:[#allocation2 + $0xe0] sm:$0xff]
    %v112 = vld [vmem:[#allocation2 + $0xe8] sm:$0xff]
    %v113 = vld [vmem:[#allocation2 + $0xf0] sm:$0xff]
    %v114 = vld [vmem:[#allocation2 + $0xf8] sm:$0xff]
    %v115 = vld [vmem:[#allocation2 + $0x100] sm:$0xff]
    %v116 = vld [vmem:[#allocation2 + $0x108] sm:$0xff]
    %v117 = vld [vmem:[#allocation2 + $0x110] sm:$0xff]
    %v118 = vld [vmem:[#allocation2 + $0x118] sm:$0xff]
    %v119 = vld [vmem:[#allocation2 + $0x120] sm:$0xff]
    %v120 = vld [vmem:[#allocation2 + $0x128] sm:$0xff]
    %v121 = vld [vmem:[#allocation2 + $0x130] sm:$0xff]
    %v122 = vld [vmem:[#allocation2 + $0x138] sm:$0xff]
    %v123 = vld [vmem:[#allocation2 + $0x140] sm:$0xff]
    %v124 = vld [vmem:[#allocation2 + $0x148] sm:$0xff]
    %v125 = vld [vmem:[#allocation2 + $0x150] sm:$0xff]
    %v126 = vld [vmem:[#allocation2 + $0x158] sm:$0xff]
    %v127 = vld [vmem:[#allocation2 + $0x160] sm:$0xff]
    %v128 = vld [vmem:[#allocation2 + $0x168] sm:$0xff]
    %v129 = vld [vmem:[#allocation2 + $0x170] sm:$0xff]
    %v130 = vld [vmem:[#allocation2 + $0x178] sm:$0xff]
    %v131 = vld [vmem:[#allocation2 + $0x180] sm:$0xff]
    %v132 = vld [vmem:[#allocation2 + $0x188] sm:$0xff]
    %v133 = vld [vmem:[#allocation2 + $0x190] sm:$0xff]
    %v134 = vld [vmem:[#allocation2 + $0x198] sm:$0xff]
    %v135 = vld [vmem:[#allocation2 + $0x1a0] sm:$0xff]
    %v136 = vld [vmem:[#allocation2 + $0x1a8] sm:$0xff]
    %v137 = vld [vmem:[#allocation2 + $0x1b0] sm:$0xff]
    %v138 = vld [vmem:[#allocation2 + $0x1b8] sm:$0xff]
    %v139 = vld [vmem:[#allocation2 + $0x1c0] sm:$0xff]
    %v140 = vld [vmem:[#allocation2 + $0x1c8] sm:$0xff]
    %v141 = vld [vmem:[#allocation2 + $0x1d0] sm:$0xff]
    %v142 = vld [vmem:[#allocation2 + $0x1d8] sm:$0xff]
    %v143 = vld [vmem:[#allocation2 + $0x1e0] sm:$0xff]
    %v144 = vld [vmem:[#allocation2 + $0x1e8] sm:$0xff]
    %v145 = vld [vmem:[#allocation2 + $0x1f0] sm:$0xff]
    %v146 = vld [vmem:[#allocation2 + $0x1f8] sm:$0xff]
    %v147 = vadd.f32 %v83, %v84
    %148 = vadd.xlane.f32.xlu0 %v147
    %v149 = vpop.xlane.xlu0 %148
    %v150 = vadd.f32 %v85, %v86
    %151 = vadd.xlane.f32.xlu0 %v150
    %v152 = vpop.xlane.xlu0 %151
    %v153 = vadd.f32 %v87, %v88
    %154 = vadd.xlane.f32.xlu0 %v153
    %v155 = vpop.xlane.xlu0 %154
    %v156 = vadd.f32 %v89, %v90
    %157 = vadd.xlane.f32.xlu0 %v156
    %v158 = vpop.xlane.xlu0 %157
    %v159 = vadd.f32 %v91, %v92
    %160 = vadd.xlane.f32.xlu0 %v159
    %v161 = vpop.xlane.xlu0 %160
    %v162 = vadd.f32 %v93, %v94
    %163 = vadd.xlane.f32.xlu0 %v162
    %v164 = vpop.xlane.xlu0 %163
    %v165 = vadd.f32 %v95, %v96
    %166 = vadd.xlane.f32.xlu0 %v165
    %v167 = vpop.xlane.xlu0 %166
    %v168 = vadd.f32 %v97, %v98
    %169 = vadd.xlane.f32.xlu0 %v168
    %v170 = vpop.xlane.xlu0 %169
    %v171 = vadd.f32 %v99, %v100
    %172 = vadd.xlane.f32.xlu0 %v171
    %v173 = vpop.xlane.xlu0 %172
    %v174 = vadd.f32 %v101, %v102
    %175 = vadd.xlane.f32.xlu0 %v174
    %v176 = vpop.xlane.xlu0 %175
    %v177 = vadd.f32 %v103, %v104
    %178 = vadd.xlane.f32.xlu0 %v177
    %v179 = vpop.xlane.xlu0 %178
    %v180 = vadd.f32 %v105, %v106
    %181 = vadd.xlane.f32.xlu0 %v180
    %v182 = vpop.xlane.xlu0 %181
    %v183 = vadd.f32 %v107, %v108
    %184 = vadd.xlane.f32.xlu0 %v183
    %v185 = vpop.xlane.xlu0 %184
    %v186 = vadd.f32 %v109, %v110
    %187 = vadd.xlane.f32.xlu0 %v186
    %v188 = vpop.xlane.xlu0 %187
    %v189 = vadd.f32 %v111, %v112
    %190 = vadd.xlane.f32.xlu0 %v189
    %v191 = vpop.xlane.xlu0 %190
    %v192 = vadd.f32 %v113, %v114
    %193 = vadd.xlane.f32.xlu0 %v192
    %v194 = vpop.xlane.xlu0 %193
    %v195 = vadd.f32 %v115, %v116
    %196 = vadd.xlane.f32.xlu0 %v195
    %v197 = vpop.xlane.xlu0 %196
    %v198 = vadd.f32 %v117, %v118
    %199 = vadd.xlane.f32.xlu0 %v198
    %v200 = vpop.xlane.xlu0 %199
    %v201 = vadd.f32 %v119, %v120
    %202 = vadd.xlane.f32.xlu0 %v201
    %v203 = vpop.xlane.xlu0 %202
    %v204 = vadd.f32 %v121, %v122
    %205 = vadd.xlane.f32.xlu0 %v204
    %v206 = vpop.xlane.xlu0 %205
    %v207 = vadd.f32 %v123, %v124
    %208 = vadd.xlane.f32.xlu0 %v207
    %v209 = vpop.xlane.xlu0 %208
    %v210 = vadd.f32 %v125, %v126
    %211 = vadd.xlane.f32.xlu0 %v210
    %v212 = vpop.xlane.xlu0 %211
    %v213 = vadd.f32 %v127, %v128
    %214 = vadd.xlane.f32.xlu0 %v213
    %v215 = vpop.xlane.xlu0 %214
    %v216 = vadd.f32 %v129, %v130
    %217 = vadd.xlane.f32.xlu0 %v216
    %v218 = vpop.xlane.xlu0 %217
    %v219 = vadd.f32 %v131, %v132
    %220 = vadd.xlane.f32.xlu0 %v219
    %v221 = vpop.xlane.xlu0 %220
    %v222 = vadd.f32 %v133, %v134
    %223 = vadd.xlane.f32.xlu0 %v222
    %v224 = vpop.xlane.xlu0 %223
    %v225 = vadd.f32 %v135, %v136
    %226 = vadd.xlane.f32.xlu0 %v225
    %v227 = vpop.xlane.xlu0 %226
    %v228 = vadd.f32 %v137, %v138
    %229 = vadd.xlane.f32.xlu0 %v228
    %v230 = vpop.xlane.xlu0 %229
    %v231 = vadd.f32 %v139, %v140
    %232 = vadd.xlane.f32.xlu0 %v231
    %v233 = vpop.xlane.xlu0 %232
    %v234 = vadd.f32 %v141, %v142
    %235 = vadd.xlane.f32.xlu0 %v234
    %v236 = vpop.xlane.xlu0 %235
    %v237 = vadd.f32 %v143, %v144
    %238 = vadd.xlane.f32.xlu0 %v237
    %v239 = vpop.xlane.xlu0 %238
    %v240 = vadd.f32 %v145, %v146
    %241 = vadd.xlane.f32.xlu0 %v240
    %v242 = vpop.xlane.xlu0 %241
    %v243 = vrcp.pop 256.0
    %v244 = vmul.f32 %v149, %v243
    %v245 = vmul.f32 %v152, %v243
    %v246 = vmul.f32 %v155, %v243
    %v247 = vmul.f32 %v158, %v243
    %v248 = vmul.f32 %v161, %v243
    %v249 = vmul.f32 %v164, %v243
    %v250 = vmul.f32 %v167, %v243
    %v251 = vmul.f32 %v170, %v243
    %v252 = vmul.f32 %v173, %v243
    %v253 = vmul.f32 %v176, %v243
    %v254 = vmul.f32 %v179, %v243
    %v255 = vmul.f32 %v182, %v243
    %v256 = vmul.f32 %v185, %v243
    %v257 = vmul.f32 %v188, %v243
    %v258 = vmul.f32 %v191, %v243
    %v259 = vmul.f32 %v194, %v243
    %v260 = vmul.f32 %v197, %v243
    %v261 = vmul.f32 %v200, %v243
    %v262 = vmul.f32 %v203, %v243
    %v263 = vmul.f32 %v206, %v243
    %v264 = vmul.f32 %v209, %v243
    %v265 = vmul.f32 %v212, %v243
    %v266 = vmul.f32 %v215, %v243
    %v267 = vmul.f32 %v218, %v243
    %v268 = vmul.f32 %v221, %v243
    %v269 = vmul.f32 %v224, %v243
    %v270 = vmul.f32 %v227, %v243
    %v271 = vmul.f32 %v230, %v243
    %v272 = vmul.f32 %v233, %v243
    %v273 = vmul.f32 %v236, %v243
    %v274 = vmul.f32 %v239, %v243
    %v275 = vmul.f32 %v242, %v243
    %v276 = vld [vmem:[#allocation5] sm:$0xff]
    %v277 = vld [vmem:[#allocation5 + $0x8] sm:$0xff]
    %v278 = vld [vmem:[#allocation5 + $0x10] sm:$0xff]
    %v279 = vld [vmem:[#allocation5 + $0x18] sm:$0xff]
    %v280 = vld [vmem:[#allocation7] sm:$0x1]
    %v282 = vlaneseq
    %v283 = vshrl.u32 %v282, 7
    %v284 = vsub.s32 0, %v283
    %v285 = vrot.slane %v280, %v284
    %v319 = vlaneseq
    %v320 = vand.u32 %v319, 127
    %v321 = vlaneseq
    %v322 = vshrl.u32 %v321, 7
    %v323 = vsub.s32 %v320, %v322
    %v324 = vrot.slane %v244, %v323
    %v325 = vadd.s32 %v320, 4294967288
    %v326 = vlaneseq
    %v327 = vshrl.u32 %v326, 7
    %v328 = vsub.s32 %v325, %v327
    %v329 = vrot.slane %v245, %v328
    %vm330 = vcmask 130112
    %v331 = vsel %vm330, %v329, %v324
    %v332 = vadd.s32 %v320, 4294967280
    %v333 = vlaneseq
    %v334 = vshrl.u32 %v333, 7
    %v335 = vsub.s32 %v332, %v334
    %v336 = vrot.slane %v246, %v335
    %vm337 = vcmask 195712
    %v338 = vsel %vm337, %v336, %v331
    %v339 = vadd.s32 %v320, 4294967272
    %v340 = vlaneseq
    %v341 = vshrl.u32 %v340, 7
    %v342 = vsub.s32 %v339, %v341
    %v343 = vrot.slane %v247, %v342
    %vm344 = vcmask 261312
    %v345 = vsel %vm344, %v343, %v338
    %v346 = vlaneseq
    %v347 = vshrl.u32 %v346, 7
    %v348 = vsub.s32 %v320, %v347
    %v349 = vrot.slane %v248, %v348
    %v350 = vlaneseq
    %v351 = vshrl.u32 %v350, 7
    %v352 = vsub.s32 %v325, %v351
    %v353 = vrot.slane %v249, %v352
    %v354 = vsel %vm330, %v353, %v349
    %v355 = vlaneseq
    %v356 = vshrl.u32 %v355, 7
    %v357 = vsub.s32 %v332, %v356
    %v358 = vrot.slane %v250, %v357
    %v359 = vsel %vm337, %v358, %v354
    %v360 = vlaneseq
    %v361 = vshrl.u32 %v360, 7
    %v362 = vsub.s32 %v339, %v361
    %v363 = vrot.slane %v251, %v362
    %v364 = vsel %vm344, %v363, %v359
    %v365 = vlaneseq
    %v366 = vshrl.u32 %v365, 7
    %v367 = vsub.s32 %v320, %v366
    %v368 = vrot.slane %v252, %v367
    %v369 = vlaneseq
    %v370 = vshrl.u32 %v369, 7
    %v371 = vsub.s32 %v325, %v370
    %v372 = vrot.slane %v253, %v371
    %v373 = vsel %vm330, %v372, %v368
    %v374 = vlaneseq
    %v375 = vshrl.u32 %v374, 7
    %v376 = vsub.s32 %v332, %v375
    %v377 = vrot.slane %v254, %v376
    %v378 = vsel %vm337, %v377, %v373
    %v379 = vlaneseq
    %v380 = vshrl.u32 %v379, 7
    %v381 = vsub.s32 %v339, %v380
    %v382 = vrot.slane %v255, %v381
    %v383 = vsel %vm344, %v382, %v378
    %v384 = vlaneseq
    %v385 = vshrl.u32 %v384, 7
    %v386 = vsub.s32 %v320, %v385
    %v387 = vrot.slane %v256, %v386
    %v388 = vlaneseq
    %v389 = vshrl.u32 %v388, 7
    %v390 = vsub.s32 %v325, %v389
    %v391 = vrot.slane %v257, %v390
    %v392 = vsel %vm330, %v391, %v387
    %v393 = vlaneseq
    %v394 = vshrl.u32 %v393, 7
    %v395 = vsub.s32 %v332, %v394
    %v396 = vrot.slane %v258, %v395
    %v397 = vsel %vm337, %v396, %v392
    %v398 = vlaneseq
    %v399 = vshrl.u32 %v398, 7
    %v400 = vsub.s32 %v339, %v399
    %v401 = vrot.slane %v259, %v400
    %v402 = vsel %vm344, %v401, %v397
    %v403 = vlaneseq
    %v404 = vshrl.u32 %v403, 7
    %v405 = vsub.s32 %v320, %v404
    %v406 = vrot.slane %v260, %v405
    %v407 = vlaneseq
    %v408 = vshrl.u32 %v407, 7
    %v409 = vsub.s32 %v325, %v408
    %v410 = vrot.slane %v261, %v409
    %v411 = vsel %vm330, %v410, %v406
    %v412 = vlaneseq
    %v413 = vshrl.u32 %v412, 7
    %v414 = vsub.s32 %v332, %v413
    %v415 = vrot.slane %v262, %v414
    %v416 = vsel %vm337, %v415, %v411
    %v417 = vlaneseq
    %v418 = vshrl.u32 %v417, 7
    %v419 = vsub.s32 %v339, %v418
    %v420 = vrot.slane %v263, %v419
    %v421 = vsel %vm344, %v420, %v416
    %v422 = vlaneseq
    %v423 = vshrl.u32 %v422, 7
    %v424 = vsub.s32 %v320, %v423
    %v425 = vrot.slane %v264, %v424
    %v426 = vlaneseq
    %v427 = vshrl.u32 %v426, 7
    %v428 = vsub.s32 %v325, %v427
    %v429 = vrot.slane %v265, %v428
    %v430 = vsel %vm330, %v429, %v425
    %v431 = vlaneseq
    %v432 = vshrl.u32 %v431, 7
    %v433 = vsub.s32 %v332, %v432
    %v434 = vrot.slane %v266, %v433
    %v435 = vsel %vm337, %v434, %v430
    %v436 = vlaneseq
    %v437 = vshrl.u32 %v436, 7
    %v438 = vsub.s32 %v339, %v437
    %v439 = vrot.slane %v267, %v438
    %v440 = vsel %vm344, %v439, %v435
    %v441 = vlaneseq
    %v442 = vshrl.u32 %v441, 7
    %v443 = vsub.s32 %v320, %v442
    %v444 = vrot.slane %v268, %v443
    %v445 = vlaneseq
    %v446 = vshrl.u32 %v445, 7
    %v447 = vsub.s32 %v325, %v446
    %v448 = vrot.slane %v269, %v447
    %v449 = vsel %vm330, %v448, %v444
    %v450 = vlaneseq
    %v451 = vshrl.u32 %v450, 7
    %v452 = vsub.s32 %v332, %v451
    %v453 = vrot.slane %v270, %v452
    %v454 = vsel %vm337, %v453, %v449
    %v455 = vlaneseq
    %v456 = vshrl.u32 %v455, 7
    %v457 = vsub.s32 %v339, %v456
    %v458 = vrot.slane %v271, %v457
    %v459 = vsel %vm344, %v458, %v454
    %v460 = vlaneseq
    %v461 = vshrl.u32 %v460, 7
    %v462 = vsub.s32 %v320, %v461
    %v463 = vrot.slane %v272, %v462
    %v464 = vlaneseq
    %v465 = vshrl.u32 %v464, 7
    %v466 = vsub.s32 %v325, %v465
    %v467 = vrot.slane %v273, %v466
    %v468 = vsel %vm330, %v467, %v463
    %v469 = vlaneseq
    %v470 = vshrl.u32 %v469, 7
    %v471 = vsub.s32 %v332, %v470
    %v472 = vrot.slane %v274, %v471
    %v473 = vsel %vm337, %v472, %v468
    %v474 = vlaneseq
    %v475 = vshrl.u32 %v474, 7
    %v476 = vsub.s32 %v339, %v475
    %v477 = vrot.slane %v275, %v476
    %v478 = vsel %vm344, %v477, %v473
    %vm479 = vcmask 1041409
    %v480 = vsel %vm479, %v364, %v345
    %vm481 = vcmask 1042434
    %v482 = vsel %vm481, %v383, %v480
    %vm483 = vcmask 1043459
    %v484 = vsel %vm483, %v402, %v482
    %vm485 = vcmask 1044484
    %v486 = vsel %vm485, %v421, %v484
    %vm487 = vcmask 1045509
    %v488 = vsel %vm487, %v440, %v486
    %vm489 = vcmask 1046534
    %v490 = vsel %vm489, %v459, %v488
    %vm491 = vcmask 1047559
    %v492 = vsel %vm491, %v478, %v490
    %vm493 = vcmask 261120
    %v494 = vsel %vm493, %v492, 0
    %496 = vmatprep.subr.mxu0 0.0
    %497 = vmatpush1.msra.mxu0 %v276
    %498 = vmatprep.subr.mxu0 0.0
    %499 = vmatpush1.msra.mxu0 %v277
    %500 = vmatprep.subr.mxu0 0.0
    %501 = vmatpush1.msra.mxu0 %v278
    %502 = vmatprep.subr.mxu0 0.0
    %503 = vmatpush1.msra.mxu0 %v279
    %504 = vmatprep.subr.mxu0 0.0
    %505 = vmatpush1.msra.mxu0 0.0
    %506 = vmatprep.subr.mxu0 0.0
    %507 = vmatpush1.msra.mxu0 0.0
    %508 = vmatprep.subr.mxu0 0.0
    %509 = vmatpush1.msra.mxu0 0.0
    %510 = vmatprep.subr.mxu0 0.0
    %511 = vmatpush1.msra.mxu0 0.0
    %512 = vmatprep.subr.mxu0 0.0
    %513 = vmatpush1.msra.mxu0 0.0
    %514 = vmatprep.subr.mxu0 0.0
    %515 = vmatpush1.msra.mxu0 0.0
    %516 = vmatprep.subr.mxu0 0.0
    %517 = vmatpush1.msra.mxu0 0.0
    %518 = vmatprep.subr.mxu0 0.0
    %519 = vmatpush1.msra.mxu0 0.0
    %520 = vmatprep.subr.mxu0 0.0
    %521 = vmatpush1.msra.mxu0 0.0
    %522 = vmatprep.subr.mxu0 0.0
    %523 = vmatpush1.msra.mxu0 0.0
    %524 = vmatprep.subr.mxu0 0.0
    %525 = vmatpush1.msra.mxu0 0.0
    %526 = vmatprep.subr.mxu0 0.0
    %527 = vmatpush1.msra.mxu0 0.0
    %528 = vmatprep.subr.mxu0 0.0
    %529 = vmatpush1.msra.mxu0 0.0
    %530 = vmatprep.subr.mxu0 0.0
    %531 = vmatpush1.msra.mxu0 0.0
    %532 = vmatprep.subr.mxu0 0.0
    %533 = vmatpush1.msra.mxu0 0.0
    %534 = vmatprep.subr.mxu0 0.0
    %535 = vmatpush1.msra.mxu0 0.0
    %536 = vmatprep.subr.mxu0 0.0
    %537 = vmatpush1.msra.mxu0 0.0
    %538 = vmatprep.subr.mxu0 0.0
    %539 = vmatpush1.msra.mxu0 0.0
    %540 = vmatprep.subr.mxu0 0.0
    %541 = vmatpush1.msra.mxu0 0.0
    %542 = vmatprep.subr.mxu0 0.0
    %543 = vmatpush1.msra.mxu0 0.0
    %544 = vmatprep.subr.mxu0 0.0
    %545 = vmatpush1.msra.mxu0 0.0
    %546 = vmatprep.subr.mxu0 0.0
    %547 = vmatpush1.msra.mxu0 0.0
    %548 = vmatprep.subr.mxu0 0.0
    %549 = vmatpush1.msra.mxu0 0.0
    %550 = vmatprep.subr.mxu0 0.0
    %551 = vmatpush1.msra.mxu0 0.0
    %552 = vmatprep.subr.mxu0 0.0
    %553 = vmatpush1.msra.mxu0 0.0
    %554 = vmatprep.subr.mxu0 0.0
    %555 = vmatpush1.msra.mxu0 0.0
    %556 = vmatprep.subr.mxu0 0.0
    %557 = vmatpush1.msra.mxu0 0.0
    %558 = vmatprep.subr.mxu0 0.0
    %559 = vmatpush1.msra.mxu0 0.0
    %560 = vmatprep.mubr.f32.mxu0 0.0
    %561 = vmatmul.mubr.f32.gmra.mrb[0].mxu0 %v494
    %v562 = vpop.f32.mrb[0].mxu0
    %v563 = vadd.f32 %v285, %v562
    %v564 = vpop.f32.mrb[0].mxu0
    %565 = vdwg.mxu0
    %v566 = vxor.u32 %v563, 2147483648
    %v567 = vmul.f32 %v566, 1.442695
    %v568 = vpow.pop %v567
    %v569 = vadd.f32 %v568, 1.0
    %v570 = vrcp.pop %v569
    %v571 = vmul.f32 1.0, %v570
    %v572 = vmul.f32 %v563, %v571
    %v573 = vld [vmem:[#allocation8] sm:$0xff]
    %v574 = vld [vmem:[#allocation10] sm:$0x1]
    %v576 = vlaneseq
    %v577 = vshrl.u32 %v576, 7
    %v578 = vsub.s32 0, %v577
    %v579 = vrot.slane %v574, %v578
    %vm581 = vcmask 64512
    %v583 = vsel %vm581, %v572, 0
    %585 = vmatprep.subr.mxu0 0.0
    %586 = vmatpush1.msra.mxu0 %v573
    %587 = vmatprep.subr.mxu0 0.0
    %588 = vmatpush1.msra.mxu0 0.0
    %589 = vmatprep.subr.mxu0 0.0
    %590 = vmatpush1.msra.mxu0 0.0
    %591 = vmatprep.subr.mxu0 0.0
    %592 = vmatpush1.msra.mxu0 0.0
    %593 = vmatprep.subr.mxu0 0.0
    %594 = vmatpush1.msra.mxu0 0.0
    %595 = vmatprep.subr.mxu0 0.0
    %596 = vmatpush1.msra.mxu0 0.0
    %597 = vmatprep.subr.mxu0 0.0
    %598 = vmatpush1.msra.mxu0 0.0
    %599 = vmatprep.subr.mxu0 0.0
    %600 = vmatpush1.msra.mxu0 0.0
    %601 = vmatprep.subr.mxu0 0.0
    %602 = vmatpush1.msra.mxu0 0.0
    %603 = vmatprep.subr.mxu0 0.0
    %604 = vmatpush1.msra.mxu0 0.0
    %605 = vmatprep.subr.mxu0 0.0
    %606 = vmatpush1.msra.mxu0 0.0
    %607 = vmatprep.subr.mxu0 0.0
    %608 = vmatpush1.msra.mxu0 0.0
    %609 = vmatprep.subr.mxu0 0.0
    %610 = vmatpush1.msra.mxu0 0.0
    %611 = vmatprep.subr.mxu0 0.0
    %612 = vmatpush1.msra.mxu0 0.0
    %613 = vmatprep.subr.mxu0 0.0
    %614 = vmatpush1.msra.mxu0 0.0
    %615 = vmatprep.subr.mxu0 0.0
    %616 = vmatpush1.msra.mxu0 0.0
    %617 = vmatprep.subr.mxu0 0.0
    %618 = vmatpush1.msra.mxu0 0.0
    %619 = vmatprep.subr.mxu0 0.0
    %620 = vmatpush1.msra.mxu0 0.0
    %621 = vmatprep.subr.mxu0 0.0
    %622 = vmatpush1.msra.mxu0 0.0
    %623 = vmatprep.subr.mxu0 0.0
    %624 = vmatpush1.msra.mxu0 0.0
    %625 = vmatprep.subr.mxu0 0.0
    %626 = vmatpush1.msra.mxu0 0.0
    %627 = vmatprep.subr.mxu0 0.0
    %628 = vmatpush1.msra.mxu0 0.0
    %629 = vmatprep.subr.mxu0 0.0
    %630 = vmatpush1.msra.mxu0 0.0
    %631 = vmatprep.subr.mxu0 0.0
    %632 = vmatpush1.msra.mxu0 0.0
    %633 = vmatprep.subr.mxu0 0.0
    %634 = vmatpush1.msra.mxu0 0.0
    %635 = vmatprep.subr.mxu0 0.0
    %636 = vmatpush1.msra.mxu0 0.0
    %637 = vmatprep.subr.mxu0 0.0
    %638 = vmatpush1.msra.mxu0 0.0
    %639 = vmatprep.subr.mxu0 0.0
    %640 = vmatpush1.msra.mxu0 0.0
    %641 = vmatprep.subr.mxu0 0.0
    %642 = vmatpush1.msra.mxu0 0.0
    %643 = vmatprep.subr.mxu0 0.0
    %644 = vmatpush1.msra.mxu0 0.0
    %645 = vmatprep.subr.mxu0 0.0
    %646 = vmatpush1.msra.mxu0 0.0
    %647 = vmatprep.subr.mxu0 0.0
    %648 = vmatpush1.msra.mxu0 0.0
    %649 = vmatprep.mubr.f32.mxu0 0.0
    %650 = vmatmul.mubr.f32.gmra.mrb[0].mxu0 %v583
    %v651 = vpop.f32.mrb[0].mxu0
    %v652 = vadd.f32 %v579, %v651
    %v653 = vpop.f32.mrb[0].mxu0
    %654 = vdwg.mxu0
    %v655 = vxor.u32 %v652, 2147483648
    %v656 = vmul.f32 %v655, 1.442695
    %v657 = vpow.pop %v656
    %v658 = vadd.f32 %v657, 1.0
    %v659 = vrcp.pop %v658
    %v660 = vmul.f32 1.0, %v659
    %v661 = vlaneseq
    %v662 = vshrl.u32 %v661, 7
    %v663 = vsub.s32 0, %v662
    %v664 = vrot.slane %v660, %v663
    %666 = vbcast.lane.b32.xlu0 %v664, 256
    %v667 = vpop.permute.xlu0 %666
    %s669 = sor.u32 256, 8
    %670 = vbcast.lane.b32.xlu0 %v664, %s669
    %v671 = vpop.permute.xlu0 %670
    %s673 = sor.u32 256, 16
    %674 = vbcast.lane.b32.xlu0 %v664, %s673
    %v675 = vpop.permute.xlu0 %674
    %s677 = sor.u32 256, 24
    %678 = vbcast.lane.b32.xlu0 %v664, %s677
    %v679 = vpop.permute.xlu0 %678
    %v680 = vlaneseq
    %v681 = vshrl.u32 %v680, 7
    %v682 = vsub.s32 1, %v681
    %v683 = vrot.slane %v660, %v682
    %685 = vbcast.lane.b32.xlu0 %v683, 256
    %v686 = vpop.permute.xlu0 %685
    %s688 = sor.u32 256, 8
    %689 = vbcast.lane.b32.xlu0 %v683, %s688
    %v690 = vpop.permute.xlu0 %689
    %s692 = sor.u32 256, 16
    %693 = vbcast.lane.b32.xlu0 %v683, %s692
    %v694 = vpop.permute.xlu0 %693
    %s696 = sor.u32 256, 24
    %697 = vbcast.lane.b32.xlu0 %v683, %s696
    %v698 = vpop.permute.xlu0 %697
    %v699 = vlaneseq
    %v700 = vshrl.u32 %v699, 7
    %v701 = vsub.s32 2, %v700
    %v702 = vrot.slane %v660, %v701
    %704 = vbcast.lane.b32.xlu0 %v702, 256
    %v705 = vpop.permute.xlu0 %704
    %s707 = sor.u32 256, 8
    %708 = vbcast.lane.b32.xlu0 %v702, %s707
    %v709 = vpop.permute.xlu0 %708
    %s711 = sor.u32 256, 16
    %712 = vbcast.lane.b32.xlu0 %v702, %s711
    %v713 = vpop.permute.xlu0 %712
    %s715 = sor.u32 256, 24
    %716 = vbcast.lane.b32.xlu0 %v702, %s715
    %v717 = vpop.permute.xlu0 %716
    %v718 = vlaneseq
    %v719 = vshrl.u32 %v718, 7
    %v720 = vsub.s32 3, %v719
    %v721 = vrot.slane %v660, %v720
    %723 = vbcast.lane.b32.xlu0 %v721, 256
    %v724 = vpop.permute.xlu0 %723
    %s726 = sor.u32 256, 8
    %727 = vbcast.lane.b32.xlu0 %v721, %s726
    %v728 = vpop.permute.xlu0 %727
    %s730 = sor.u32 256, 16
    %731 = vbcast.lane.b32.xlu0 %v721, %s730
    %v732 = vpop.permute.xlu0 %731
    %s734 = sor.u32 256, 24
    %735 = vbcast.lane.b32.xlu0 %v721, %s734
    %v736 = vpop.permute.xlu0 %735
    %v737 = vlaneseq
    %v738 = vshrl.u32 %v737, 7
    %v739 = vsub.s32 4, %v738
    %v740 = vrot.slane %v660, %v739
    %742 = vbcast.lane.b32.xlu0 %v740, 256
    %v743 = vpop.permute.xlu0 %742
    %s745 = sor.u32 256, 8
    %746 = vbcast.lane.b32.xlu0 %v740, %s745
    %v747 = vpop.permute.xlu0 %746
    %s749 = sor.u32 256, 16
    %750 = vbcast.lane.b32.xlu0 %v740, %s749
    %v751 = vpop.permute.xlu0 %750
    %s753 = sor.u32 256, 24
    %754 = vbcast.lane.b32.xlu0 %v740, %s753
    %v755 = vpop.permute.xlu0 %754
    %v756 = vlaneseq
    %v757 = vshrl.u32 %v756, 7
    %v758 = vsub.s32 5, %v757
    %v759 = vrot.slane %v660, %v758
    %761 = vbcast.lane.b32.xlu0 %v759, 256
    %v762 = vpop.permute.xlu0 %761
    %s764 = sor.u32 256, 8
    %765 = vbcast.lane.b32.xlu0 %v759, %s764
    %v766 = vpop.permute.xlu0 %765
    %s768 = sor.u32 256, 16
    %769 = vbcast.lane.b32.xlu0 %v759, %s768
    %v770 = vpop.permute.xlu0 %769
    %s772 = sor.u32 256, 24
    %773 = vbcast.lane.b32.xlu0 %v759, %s772
    %v774 = vpop.permute.xlu0 %773
    %v775 = vlaneseq
    %v776 = vshrl.u32 %v775, 7
    %v777 = vsub.s32 6, %v776
    %v778 = vrot.slane %v660, %v777
    %780 = vbcast.lane.b32.xlu0 %v778, 256
    %v781 = vpop.permute.xlu0 %780
    %s783 = sor.u32 256, 8
    %784 = vbcast.lane.b32.xlu0 %v778, %s783
    %v785 = vpop.permute.xlu0 %784
    %s787 = sor.u32 256, 16
    %788 = vbcast.lane.b32.xlu0 %v778, %s787
    %v789 = vpop.permute.xlu0 %788
    %s791 = sor.u32 256, 24
    %792 = vbcast.lane.b32.xlu0 %v778, %s791
    %v793 = vpop.permute.xlu0 %792
    %v794 = vlaneseq
    %v795 = vshrl.u32 %v794, 7
    %v796 = vsub.s32 7, %v795
    %v797 = vrot.slane %v660, %v796
    %799 = vbcast.lane.b32.xlu0 %v797, 256
    %v800 = vpop.permute.xlu0 %799
    %s802 = sor.u32 256, 8
    %803 = vbcast.lane.b32.xlu0 %v797, %s802
    %v804 = vpop.permute.xlu0 %803
    %s806 = sor.u32 256, 16
    %807 = vbcast.lane.b32.xlu0 %v797, %s806
    %v808 = vpop.permute.xlu0 %807
    %s810 = sor.u32 256, 24
    %811 = vbcast.lane.b32.xlu0 %v797, %s810
    %v812 = vpop.permute.xlu0 %811
    %v813 = vmul.f32 %v667, %v83
    %v814 = vmul.f32 %v667, %v84
    %v815 = vmul.f32 %v671, %v85
    %v816 = vmul.f32 %v671, %v86
    %v817 = vmul.f32 %v675, %v87
    %v818 = vmul.f32 %v675, %v88
    %v819 = vmul.f32 %v679, %v89
    %v820 = vmul.f32 %v679, %v90
    %v821 = vmul.f32 %v686, %v91
    %v822 = vmul.f32 %v686, %v92
    %v823 = vmul.f32 %v690, %v93
    %v824 = vmul.f32 %v690, %v94
    %v825 = vmul.f32 %v694, %v95
    %v826 = vmul.f32 %v694, %v96
    %v827 = vmul.f32 %v698, %v97
    %v828 = vmul.f32 %v698, %v98
    %v829 = vmul.f32 %v705, %v99
    %v830 = vmul.f32 %v705, %v100
    %v831 = vmul.f32 %v709, %v101
    %v832 = vmul.f32 %v709, %v102
    %v833 = vmul.f32 %v713, %v103
    %v834 = vmul.f32 %v713, %v104
    %v835 = vmul.f32 %v717, %v105
    %v836 = vmul.f32 %v717, %v106
    %v837 = vmul.f32 %v724, %v107
    %v838 = vmul.f32 %v724, %v108
    %v839 = vmul.f32 %v728, %v109
    %v840 = vmul.f32 %v728, %v110
    %v841 = vmul.f32 %v732, %v111
    %v842 = vmul.f32 %v732, %v112
    %v843 = vmul.f32 %v736, %v113
    %v844 = vmul.f32 %v736, %v114
    %v845 = vmul.f32 %v743, %v115
    %v846 = vmul.f32 %v743, %v116
    %v847 = vmul.f32 %v747, %v117
    %v848 = vmul.f32 %v747, %v118
    %v849 = vmul.f32 %v751, %v119
    %v850 = vmul.f32 %v751, %v120
    %v851 = vmul.f32 %v755, %v121
    %v852 = vmul.f32 %v755, %v122
    %v853 = vmul.f32 %v762, %v123
    %v854 = vmul.f32 %v762, %v124
    %v855 = vmul.f32 %v766, %v125
    %v856 = vmul.f32 %v766, %v126
    %v857 = vmul.f32 %v770, %v127
    %v858 = vmul.f32 %v770, %v128
    %v859 = vmul.f32 %v774, %v129
    %v860 = vmul.f32 %v774, %v130
    %v861 = vmul.f32 %v781, %v131
    %v862 = vmul.f32 %v781, %v132
    %v863 = vmul.f32 %v785, %v133
    %v864 = vmul.f32 %v785, %v134
    %v865 = vmul.f32 %v789, %v135
    %v866 = vmul.f32 %v789, %v136
    %v867 = vmul.f32 %v793, %v137
    %v868 = vmul.f32 %v793, %v138
    %v869 = vmul.f32 %v800, %v139
    %v870 = vmul.f32 %v800, %v140
    %v871 = vmul.f32 %v804, %v141
    %v872 = vmul.f32 %v804, %v142
    %v873 = vmul.f32 %v808, %v143
    %v874 = vmul.f32 %v808, %v144
    %v875 = vmul.f32 %v812, %v145
    %v876 = vmul.f32 %v812, %v146
    %877 = vst [vmem:[#allocation11] sm:$0xff] %v813
    %878 = vst [vmem:[#allocation11 + $0x8] sm:$0xff] %v814
    %879 = vst [vmem:[#allocation11 + $0x10] sm:$0xff] %v815
    %880 = vst [vmem:[#allocation11 + $0x18] sm:$0xff] %v816
    %881 = vst [vmem:[#allocation11 + $0x20] sm:$0xff] %v817
    %882 = vst [vmem:[#allocation11 + $0x28] sm:$0xff] %v818
    %883 = vst [vmem:[#allocation11 + $0x30] sm:$0xff] %v819
    %884 = vst [vmem:[#allocation11 + $0x38] sm:$0xff] %v820
    %885 = vst [vmem:[#allocation11 + $0x40] sm:$0xff] %v821
    %886 = vst [vmem:[#allocation11 + $0x48] sm:$0xff] %v822
    %887 = vst [vmem:[#allocation11 + $0x50] sm:$0xff] %v823
    %888 = vst [vmem:[#allocation11 + $0x58] sm:$0xff] %v824
    %889 = vst [vmem:[#allocation11 + $0x60] sm:$0xff] %v825
    %890 = vst [vmem:[#allocation11 + $0x68] sm:$0xff] %v826
    %891 = vst [vmem:[#allocation11 + $0x70] sm:$0xff] %v827
    %892 = vst [vmem:[#allocation11 + $0x78] sm:$0xff] %v828
    %893 = vst [vmem:[#allocation11 + $0x80] sm:$0xff] %v829
    %894 = vst [vmem:[#allocation11 + $0x88] sm:$0xff] %v830
    %895 = vst [vmem:[#allocation11 + $0x90] sm:$0xff] %v831
    %896 = vst [vmem:[#allocation11 + $0x98] sm:$0xff] %v832
    %897 = vst [vmem:[#allocation11 + $0xa0] sm:$0xff] %v833
    %898 = vst [vmem:[#allocation11 + $0xa8] sm:$0xff] %v834
    %899 = vst [vmem:[#allocation11 + $0xb0] sm:$0xff] %v835
    %900 = vst [vmem:[#allocation11 + $0xb8] sm:$0xff] %v836
    %901 = vst [vmem:[#allocation11 + $0xc0] sm:$0xff] %v837
    %902 = vst [vmem:[#allocation11 + $0xc8] sm:$0xff] %v838
    %903 = vst [vmem:[#allocation11 + $0xd0] sm:$0xff] %v839
    %904 = vst [vmem:[#allocation11 + $0xd8] sm:$0xff] %v840
    %905 = vst [vmem:[#allocation11 + $0xe0] sm:$0xff] %v841
    %906 = vst [vmem:[#allocation11 + $0xe8] sm:$0xff] %v842
    %907 = vst [vmem:[#allocation11 + $0xf0] sm:$0xff] %v843
    %908 = vst [vmem:[#allocation11 + $0xf8] sm:$0xff] %v844
    %909 = vst [vmem:[#allocation11 + $0x100] sm:$0xff] %v845
    %910 = vst [vmem:[#allocation11 + $0x108] sm:$0xff] %v846
    %911 = vst [vmem:[#allocation11 + $0x110] sm:$0xff] %v847
    %912 = vst [vmem:[#allocation11 + $0x118] sm:$0xff] %v848
    %913 = vst [vmem:[#allocation11 + $0x120] sm:$0xff] %v849
    %914 = vst [vmem:[#allocation11 + $0x128] sm:$0xff] %v850
    %915 = vst [vmem:[#allocation11 + $0x130] sm:$0xff] %v851
    %916 = vst [vmem:[#allocation11 + $0x138] sm:$0xff] %v852
    %917 = vst [vmem:[#allocation11 + $0x140] sm:$0xff] %v853
    %918 = vst [vmem:[#allocation11 + $0x148] sm:$0xff] %v854
    %919 = vst [vmem:[#allocation11 + $0x150] sm:$0xff] %v855
    %920 = vst [vmem:[#allocation11 + $0x158] sm:$0xff] %v856
    %921 = vst [vmem:[#allocation11 + $0x160] sm:$0xff] %v857
    %922 = vst [vmem:[#allocation11 + $0x168] sm:$0xff] %v858
    %923 = vst [vmem:[#allocation11 + $0x170] sm:$0xff] %v859
    %924 = vst [vmem:[#allocation11 + $0x178] sm:$0xff] %v860
    %925 = vst [vmem:[#allocation11 + $0x180] sm:$0xff] %v861
    %926 = vst [vmem:[#allocation11 + $0x188] sm:$0xff] %v862
    %927 = vst [vmem:[#allocation11 + $0x190] sm:$0xff] %v863
    %928 = vst [vmem:[#allocation11 + $0x198] sm:$0xff] %v864
    %929 = vst [vmem:[#allocation11 + $0x1a0] sm:$0xff] %v865
    %930 = vst [vmem:[#allocation11 + $0x1a8] sm:$0xff] %v866
    %931 = vst [vmem:[#allocation11 + $0x1b0] sm:$0xff] %v867
    %932 = vst [vmem:[#allocation11 + $0x1b8] sm:$0xff] %v868
    %933 = vst [vmem:[#allocation11 + $0x1c0] sm:$0xff] %v869
    %934 = vst [vmem:[#allocation11 + $0x1c8] sm:$0xff] %v870
    %935 = vst [vmem:[#allocation11 + $0x1d0] sm:$0xff] %v871
    %936 = vst [vmem:[#allocation11 + $0x1d8] sm:$0xff] %v872
    %937 = vst [vmem:[#allocation11 + $0x1e0] sm:$0xff] %v873
    %938 = vst [vmem:[#allocation11 + $0x1e8] sm:$0xff] %v874
    %939 = vst [vmem:[#allocation11 + $0x1f0] sm:$0xff] %v875
    %940 = vst [vmem:[#allocation11 + $0x1f8] sm:$0xff] %v876
    // Predicated region
    $region42: #{tpu_custom_call.1} parent=1 // pred_check
      _
    $region43: #{tpu_custom_call.1} parent=1 // pred_check_branch
      %942 = sbr.rel (0) target = $region45
    $region44: #{tpu_custom_call.1} parent=1 // pred_region
      %s944 = ssub.s32 8192, 8192
      %945 = vsyncadd [#allocation4], %s944
      %s946 = sshll.u32 [#allocation11], 4
      %s947 = int_to_ptr.vmem [resolvable:$true] %s946
      %952 = dma.vmem_to_hbm [thread:$0]  %s947, 8192, %s5, [#allocation4], 256, 256, 16
    $region45: #{tpu_custom_call.1} parent=1 // pred_fallthru
      _
    // Predicated region
    $region46: #{tpu_custom_call.1} parent=1 // pred_check
      _
    $region47: #{tpu_custom_call.1} parent=1 // pred_check_branch
      %954 = sbr.rel (0) target = $region49
    $region48: #{tpu_custom_call.1} parent=1 // pred_region
      %955 = dma.done [#allocation4], 8192
    $region49: #{tpu_custom_call.1} parent=1 // pred_fallthru
      _
    %956 = vsyncpa [#allocation3], 1
    %957 = vsyncpa [#allocation6], 1
    %958 = vsyncpa [#allocation9], 1
    %959 = vsyncpa [#allocation4], 1

</llo_original>
